<compile_context>
chip_gen: v6e
topology: v6e:2x2x1
jax: 0.10.0
libtpu: 0.0.40
codegen_flags: <defaults>
</compile_context>

<pallas_src>
import functools
import math

import jax
import jax.numpy as jnp
from jax.experimental import pallas as pl
from jax.experimental.pallas import tpu as pltpu


# ------------------------------- kernel -------------------------------------
def mlp_kernel(x_ref, w1_ref, b1_ref, w2_ref, b2_ref, o_ref):
    """Fused fc1 -> ReLU -> fc2 on one (bb, d_in) batch tile."""
    x = x_ref[...]
    # fc1: MXU matmul with f32 accumulation; bias + ReLU in f32 on the VPU.
    h = jnp.dot(x, w1_ref[...], preferred_element_type=jnp.float32)
    h = jnp.maximum(h + b1_ref[...], 0.0)
    # Feed the second matmul in the input dtype (bf16 inputs -> full-rate MXU).
    h = h.astype(x.dtype)
    # fc2: MXU matmul, f32 accumulation, f32 bias add.
    z = jnp.dot(h, w2_ref[...], preferred_element_type=jnp.float32) + b2_ref[...]
    o_ref[...] = z.astype(o_ref.dtype)
    # NOTE: nothing here reduces over the batch (sublane) axis, so the garbage
    # rows of a ragged last input block can never contaminate valid outputs.


# ------------------------------- wrapper -------------------------------------
@functools.partial(jax.jit, static_argnames=("block_b",))
def mlp_forward(x, params, *, block_b=512):
    """x: (B, d_in) -> (B, d_out). Entire MLP runs inside one Pallas kernel."""
    w1, b1, w2, b2 = params
    B, d_in = x.shape
    d_hid = w1.shape[1]
    d_out = w2.shape[1]

    # Batch tiling: one full-extent tile for small B, else 512-row tiles with a
    # ragged last block (no padding, no output slice).
    bb = B if B <= block_b else block_b
    grid = (pl.cdiv(B, bb),)

    # Explicit VMEM budget: double-buffered x/out tiles, resident weights and
    # biases (+ pipeline buffers), f32 hidden activation, plus headroom.
    # TODO(synk): for large d_hid, add a K-tiling grid axis (accumulator scratch
    # + pl.when init/finalize) instead of full-extent weight blocks.
    in_b = jnp.dtype(x.dtype).itemsize
    w_b = jnp.dtype(w1.dtype).itemsize
    vmem_bytes = (
        2 * bb * d_in * in_b                          # x tiles (double-buffered)
        + 2 * bb * d_out * in_b                       # out tiles
        + 2 * (d_in * d_hid + d_hid * d_out) * w_b    # weights (2 buffers each)
        + 2 * (d_hid + d_out) * 4                     # biases (f32)
        + 2 * bb * d_hid * 4                          # f32 hidden activation
    )
    vmem_limit = min(int(2 * vmem_bytes) + (4 << 20), 64 << 20)

    cost = pl.CostEstimate(
        flops=2 * B * d_in * d_hid + 2 * B * d_hid * d_out,
        transcendentals=0,
        bytes_accessed=(B * d_in * in_b + B * d_out * in_b
                        + (d_in * d_hid + d_hid * d_out) * w_b
                        + (d_hid + d_out) * 4),
    )

    return pl.pallas_call(
        mlp_kernel,
        out_shape=jax.ShapeDtypeStruct((B, d_out), x.dtype),
        grid_spec=pltpu.PrefetchScalarGridSpec(
            num_scalar_prefetch=0,
            grid=grid,
            in_specs=[
                pl.BlockSpec((bb, d_in), lambda i: (i, 0)),      # x tile
                pl.BlockSpec((d_in, d_hid), lambda i: (0, 0)),   # fc1 weight (resident)
                pl.BlockSpec((1, d_hid), lambda i: (0, 0)),      # fc1 bias
                pl.BlockSpec((d_hid, d_out), lambda i: (0, 0)),  # fc2 weight (resident)
                pl.BlockSpec((1, d_out), lambda i: (0, 0)),      # fc2 bias
            ],
            out_specs=pl.BlockSpec((bb, d_out), lambda i: (i, 0)),
        ),
        compiler_params=pltpu.CompilerParams(
            # TODO(synk): on v7x verify this axis shards across both TensorCores;
            # if not, switch it to pltpu.CORE_PARALLEL.
            dimension_semantics=("parallel",),
            vmem_limit_bytes=vmem_limit,
        ),
        cost_estimate=cost,
    )(x, w1, b1, w2, b2)


# ----------------------------- parameter setup ------------------------------
def _uniform(key, shape, bound):
    return jax.random.uniform(key, shape, jnp.float32, minval=-bound, maxval=bound)


def init_linear(key, in_dim, out_dim):
    """PyTorch nn.Linear default init; weight returned pre-transposed for x @ W."""
    k1, k2 = jax.random.split(key)
    bound = 1.0 / math.sqrt(in_dim)
    w = _uniform(k1, (out_dim, in_dim), bound)     # PyTorch (out, in) layout
    b = _uniform(k2, (out_dim,), bound)
    return w.T, b.reshape(1, out_dim)


def init_params(key, input_size, hidden_size, output_size):
    k1, k2 = jax.random.split(key)
    return (*init_linear(k1, input_size, hidden_size),
            *init_linear(k2, hidden_size, output_size))


# ------------------------------ pure-JAX reference --------------------------
def _ref_mlp(x, params):
    w1, b1, w2, b2 = params
    h = jnp.maximum(
        jnp.dot(x, w1, precision=jax.lax.Precision.HIGHEST) + b1, 0.0)
    return jnp.dot(h, w2, precision=jax.lax.Precision.HIGHEST) + b2


# ---------------------------------- test -------------------------------------
if __name__ == "__main__":
    INPUT_SIZE, HIDDEN_SIZE, OUTPUT_SIZE = 32, 64, 16

    key = jax.random.PRNGKey(0)
    k_x, k_x2, k_p = jax.random.split(key, 3)
    params = init_params(k_p, INPUT_SIZE, HIDDEN_SIZE, OUTPUT_SIZE)

    # 1) Small batch: single full-extent tile, grid=(1,).
    B = 8
    x = jax.random.normal(k_x, (B, INPUT_SIZE), jnp.float32)
    out = mlp_forward(x, params)
    jax.block_until_ready(out)
    ref = _ref_mlp(x, params)
    assert out.shape == (B, OUTPUT_SIZE)
    assert jnp.allclose(out, ref, atol=2e-3, rtol=2e-3)

    # 2) Large ragged batch: grid=(2,), partial last block, no pad / no slice.
    B2 = 600
    x2 = jax.random.normal(k_x2, (B2, INPUT_SIZE), jnp.float32)
    out2 = mlp_forward(x2, params)
    jax.block_until_ready(out2)
    ref2 = _ref_mlp(x2, params)
    assert out2.shape == (B2, OUTPUT_SIZE)
    assert jnp.allclose(out2, ref2, atol=2e-3, rtol=2e-3)

    # 3) bf16 matmul-input path (halved HBM bytes, full-rate MXU on v6e/v7x):
    #    bf16 x / weights, f32 biases, f32 MXU accumulation inside the kernel.
    w1, b1, w2, b2 = params
    params_bf16 = (w1.astype(jnp.bfloat16), b1, w2.astype(jnp.bfloat16), b2)
    out3 = mlp_forward(x.astype(jnp.bfloat16), params_bf16)
    jax.block_until_ready(out3)
    assert out3.shape == (B, OUTPUT_SIZE) and out3.dtype == jnp.bfloat16
    assert jnp.allclose(out3.astype(jnp.float32), ref, atol=0.15, rtol=0.1)

    print("KERNEL_OK")
</pallas_src>

<mosaic_0001>
module attributes {stable_mosaic.version = 11 : i64} {
  func.func @mlp_kernel(%arg0: i32, %arg1: memref<8x32xf32, #tpu.memory_space<vmem>>, %arg2: memref<32x64xf32, #tpu.memory_space<vmem>>, %arg3: memref<1x64xf32, #tpu.memory_space<vmem>>, %arg4: memref<64x16xf32, #tpu.memory_space<vmem>>, %arg5: memref<1x16xf32, #tpu.memory_space<vmem>>, %arg6: memref<8x16xf32, #tpu.memory_space<vmem>>) attributes {dimension_semantics = [#tpu.dimension_semantics<parallel>], iteration_bounds = array<i64: 1>, scalar_prefetch = 0 : i64, scratch_operands = 0 : i64, tpu.core_type = #tpu.core_type<tc>, window_params = [{transform_indices = @transform_0, window_bounds = array<i64: 8, 32>}, {pipeline_mode = #tpu.pipeline_mode<synchronous>, transform_indices = @transform_1, window_bounds = array<i64: 32, 64>}, {pipeline_mode = #tpu.pipeline_mode<synchronous>, transform_indices = @transform_2, window_bounds = array<i64: 1, 64>}, {pipeline_mode = #tpu.pipeline_mode<synchronous>, transform_indices = @transform_3, window_bounds = array<i64: 64, 16>}, {pipeline_mode = #tpu.pipeline_mode<synchronous>, transform_indices = @transform_4, window_bounds = array<i64: 1, 16>}, {transform_indices = @transform_5, window_bounds = array<i64: 8, 16>}]} {
    %c0 = arith.constant 0 : index
    %c0_0 = arith.constant 0 : index
    %0 = vector.load %arg1[%c0, %c0_0] : memref<8x32xf32, #tpu.memory_space<vmem>>, vector<8x32xf32>
    %c0_1 = arith.constant 0 : index
    %c0_2 = arith.constant 0 : index
    %1 = vector.load %arg2[%c0_1, %c0_2] : memref<32x64xf32, #tpu.memory_space<vmem>>, vector<32x64xf32>
    %cst = arith.constant dense<0.000000e+00> : vector<8x64xf32>
    %2 = tpu.matmul %0, %1, %cst {dimension_numbers = #tpu.dot_dimension_numbers<[1], [0], [0], [1], [0, 0, 1, 1], [], []>} : vector<8x32xf32>, vector<32x64xf32>, vector<8x64xf32> -> vector<8x64xf32>
    %c0_3 = arith.constant 0 : index
    %c0_4 = arith.constant 0 : index
    %3 = vector.load %arg3[%c0_3, %c0_4] : memref<1x64xf32, #tpu.memory_space<vmem>>, vector<1x64xf32>
    %4 = vector.broadcast %3 : vector<1x64xf32> to vector<8x64xf32>
    %5 = arith.addf %2, %4 : vector<8x64xf32>
    %cst_5 = arith.constant 0.000000e+00 : f32
    %6 = vector.broadcast %cst_5 : f32 to vector<8x64xf32>
    %7 = arith.maximumf %5, %6 : vector<8x64xf32>
    %c0_6 = arith.constant 0 : index
    %c0_7 = arith.constant 0 : index
    %8 = vector.load %arg4[%c0_6, %c0_7] : memref<64x16xf32, #tpu.memory_space<vmem>>, vector<64x16xf32>
    %cst_8 = arith.constant dense<0.000000e+00> : vector<8x16xf32>
    %9 = tpu.matmul %7, %8, %cst_8 {dimension_numbers = #tpu.dot_dimension_numbers<[1], [0], [0], [1], [0, 0, 1, 1], [], []>} : vector<8x64xf32>, vector<64x16xf32>, vector<8x16xf32> -> vector<8x16xf32>
    %c0_9 = arith.constant 0 : index
    %c0_10 = arith.constant 0 : index
    %10 = vector.load %arg5[%c0_9, %c0_10] : memref<1x16xf32, #tpu.memory_space<vmem>>, vector<1x16xf32>
    %11 = vector.broadcast %10 : vector<1x16xf32> to vector<8x16xf32>
    %12 = arith.addf %9, %11 : vector<8x16xf32>
    %c0_11 = arith.constant 0 : index
    %c0_12 = arith.constant 0 : index
    %13 = vector.load %arg6[%c0_11, %c0_12] : memref<8x16xf32, #tpu.memory_space<vmem>>, vector<8x16xf32>
    tpu.vector_store %arg6[%c0_11, %c0_12], %12 {strides = array<i32>} : memref<8x16xf32, #tpu.memory_space<vmem>>, vector<8x16xf32>,
    return
  }
  func.func @transform_0(%arg0: i32) -> (i32, i32) {
    %c0_i32 = arith.constant 0 : i32
    %c0_i32_0 = arith.constant 0 : i32
    return %arg0, %c0_i32 : i32, i32
  }
  func.func @transform_1(%arg0: i32) -> (i32, i32) {
    %c0_i32 = arith.constant 0 : i32
    %c0_i32_0 = arith.constant 0 : i32
    %c0_i32_1 = arith.constant 0 : i32
    return %c0_i32, %c0_i32_0 : i32, i32
  }
  func.func @transform_2(%arg0: i32) -> (i32, i32) {
    %c0_i32 = arith.constant 0 : i32
    %c0_i32_0 = arith.constant 0 : i32
    %c0_i32_1 = arith.constant 0 : i32
    return %c0_i32, %c0_i32_0 : i32, i32
  }
  func.func @transform_3(%arg0: i32) -> (i32, i32) {
    %c0_i32 = arith.constant 0 : i32
    %c0_i32_0 = arith.constant 0 : i32
    %c0_i32_1 = arith.constant 0 : i32
    return %c0_i32, %c0_i32_0 : i32, i32
  }
  func.func @transform_4(%arg0: i32) -> (i32, i32) {
    %c0_i32 = arith.constant 0 : i32
    %c0_i32_0 = arith.constant 0 : i32
    %c0_i32_1 = arith.constant 0 : i32
    return %c0_i32, %c0_i32_0 : i32, i32
  }
  func.func @transform_5(%arg0: i32) -> (i32, i32) {
    %c0_i32 = arith.constant 0 : i32
    %c0_i32_0 = arith.constant 0 : i32
    return %arg0, %c0_i32 : i32, i32
  }
}

</mosaic_0001>

<llo_original>
// kernel: mlp_forward.1
$region0: #{mlp_forward.1}
  #allocation0 [shape = 'u32[]', space=smem, size = 0x4, offset = 0x4, fixed_abs, tag = 'smem constant byte address 0x4 - core index']
  #allocation1 [shape = 'u32[144,128]{1,0:T(1,128)}', space=vmem, size = 0x12000, scoped, tag = 'internal scratch']
  %s0 = inlined_call_operand.vmem [shape: f32[8,32], index: 0, kind: input, shape index: {}]
  %s1 = inlined_call_operand.vmem [shape: f32[32,64], index: 1, kind: input, shape index: {}]
  %s2 = inlined_call_operand.vmem [shape: f32[1,64], index: 2, kind: input, shape index: {}]
  %s3 = inlined_call_operand.vmem [shape: f32[64,16], index: 3, kind: input, shape index: {}]
  %s4 = inlined_call_operand.vmem [shape: f32[1,16], index: 4, kind: input, shape index: {}]
  %s5 = inlined_call_operand.hbm [shape: f32[8,16], index: 5, kind: output, shape index: {}]
  %s6 = sld [smem:[#allocation0]]
  $region30: #{mlp_forward.1} parent=0
    _
  %s8 = ssub.s32 1, %s6
  %s9 = scalar_select 0, %s8, %s6
  $region1: #{mlp_forward.1} parent=0
    #allocation2 [shape = 'u8[4096]{0}', space=vmem, size = 0x1000, scoped, tag = 'output window, operand 0, single buffered']
    #allocation3 [shape = 's32[1]{0}', space=sflag, size = 0x4, scoped, tag = 'scoped memory for mlp_forward.1']
    %10 = vsyncpa [#allocation3], 0
    // Predicated region
    $region2: #{mlp_forward.1} parent=1 // pred_check
      _
    $region3: #{mlp_forward.1} parent=1 // pred_check_branch
      %12 = sbr.rel (0) target = $region5
    $region4: #{mlp_forward.1} parent=1 // pred_region
      _
    $region5: #{mlp_forward.1} parent=1 // pred_fallthru
      _
    // Predicated region
    $region6: #{mlp_forward.1} parent=1 // pred_check
      _
    $region7: #{mlp_forward.1} parent=1 // pred_check_branch
      %14 = sbr.rel (0) target = $region9
    $region8: #{mlp_forward.1} parent=1 // pred_region
      _
    $region9: #{mlp_forward.1} parent=1 // pred_fallthru
      _
    // Predicated region
    $region10: #{mlp_forward.1} parent=1 // pred_check
      _
    $region11: #{mlp_forward.1} parent=1 // pred_check_branch
      %16 = sbr.rel (0) target = $region13
    $region12: #{mlp_forward.1} parent=1 // pred_region
      _
    $region13: #{mlp_forward.1} parent=1 // pred_fallthru
      _
    // Predicated region
    $region14: #{mlp_forward.1} parent=1 // pred_check
      _
    $region15: #{mlp_forward.1} parent=1 // pred_check_branch
      %18 = sbr.rel (0) target = $region17
    $region16: #{mlp_forward.1} parent=1 // pred_region
      _
    $region17: #{mlp_forward.1} parent=1 // pred_fallthru
      _
    // Predicated region
    $region18: #{mlp_forward.1} parent=1 // pred_check
      _
    $region19: #{mlp_forward.1} parent=1 // pred_check_branch
      %20 = sbr.rel (0) target = $region21
    $region20: #{mlp_forward.1} parent=1 // pred_region
      _
    $region21: #{mlp_forward.1} parent=1 // pred_fallthru
      _
    %v21 = vld [vmem:[%s0] sm:$0xff]
    %v22 = vld [vmem:[%s1] sm:$0xff]
    %v23 = vld [vmem:[%s1 + $0x8] sm:$0xff]
    %v24 = vld [vmem:[%s1 + $0x10] sm:$0xff]
    %v25 = vld [vmem:[%s1 + $0x18] sm:$0xff]
    %v26 = vld [vmem:[%s2] sm:$0x1]
    %v28 = vlaneseq
    %v29 = vshrl.u32 %v28, 7
    %v30 = vsub.s32 0, %v29
    %v31 = vrot.slane %v26, %v30
    %vm33 = vcmask 261120
    %v35 = vsel %vm33, %v21, 0
    %37 = vmatprep.subr.mxu0 0.0
    %38 = vmatpush1.msra.mxu0 0.0
    %39 = vmatprep.subr.mxu0 0.0
    %40 = vmatpush1.msra.mxu0 0.0
    %41 = vmatprep.subr.mxu0 0.0
    %42 = vmatpush1.msra.mxu0 0.0
    %43 = vmatprep.subr.mxu0 0.0
    %44 = vmatpush1.msra.mxu0 0.0
    %45 = vmatprep.subr.mxu0 0.0
    %46 = vmatpush1.msra.mxu0 0.0
    %47 = vmatprep.subr.mxu0 0.0
    %48 = vmatpush1.msra.mxu0 0.0
    %49 = vmatprep.subr.mxu0 0.0
    %50 = vmatpush1.msra.mxu0 0.0
    %51 = vmatprep.subr.mxu0 0.0
    %52 = vmatpush1.msra.mxu0 0.0
    %53 = vmatprep.subr.mxu0 0.0
    %54 = vmatpush1.msra.mxu0 0.0
    %55 = vmatprep.subr.mxu0 0.0
    %56 = vmatpush1.msra.mxu0 0.0
    %57 = vmatprep.subr.mxu0 0.0
    %58 = vmatpush1.msra.mxu0 0.0
    %59 = vmatprep.subr.mxu0 0.0
    %60 = vmatpush1.msra.mxu0 0.0
    %61 = vmatprep.subr.mxu0 0.0
    %62 = vmatpush1.msra.mxu0 %v25
    %63 = vmatprep.subr.mxu0 0.0
    %64 = vmatpush1.msra.mxu0 %v24
    %65 = vmatprep.subr.mxu0 0.0
    %66 = vmatpush1.msra.mxu0 %v23
    %67 = vmatprep.subr.mxu0 0.0
    %68 = vmatpush1.msra.mxu0 %v22
    %69 = vmatprep.subr.mxu0 0.0
    %70 = vmatpush2.msra.mxu0 0.0
    %71 = vmatprep.subr.mxu0 0.0
    %72 = vmatpush2.msra.mxu0 0.0
    %73 = vmatprep.subr.mxu0 0.0
    %74 = vmatpush2.msra.mxu0 0.0
    %75 = vmatprep.subr.mxu0 0.0
    %76 = vmatpush2.msra.mxu0 0.0
    %77 = vmatprep.subr.mxu0 0.0
    %78 = vmatpush2.msra.mxu0 0.0
    %79 = vmatprep.subr.mxu0 0.0
    %80 = vmatpush2.msra.mxu0 0.0
    %81 = vmatprep.subr.mxu0 0.0
    %82 = vmatpush2.msra.mxu0 0.0
    %83 = vmatprep.subr.mxu0 0.0
    %84 = vmatpush2.msra.mxu0 0.0
    %85 = vmatprep.subr.mxu0 0.0
    %86 = vmatpush2.msra.mxu0 0.0
    %87 = vmatprep.subr.mxu0 0.0
    %88 = vmatpush2.msra.mxu0 0.0
    %89 = vmatprep.subr.mxu0 0.0
    %90 = vmatpush2.msra.mxu0 0.0
    %91 = vmatprep.subr.mxu0 0.0
    %92 = vmatpush2.msra.mxu0 0.0
    %93 = vmatprep.subr.mxu0 0.0
    %94 = vmatpush2.msra.mxu0 0.0
    %95 = vmatprep.subr.mxu0 0.0
    %96 = vmatpush2.msra.mxu0 0.0
    %97 = vmatprep.subr.mxu0 0.0
    %98 = vmatpush2.msra.mxu0 0.0
    %99 = vmatprep.subr.mxu0 0.0
    %100 = vmatpush2.msra.mxu0 0.0
    %101 = vmatprep.mubr.f32.mxu0 0.0
    %102 = vmatmul.mubr.f32.gmra.mxu0 %v35
    %v103 = vpop.f32.mrf.mxu0
    %v104 = vadd.f32 %v31, %v103
    %v105 = vpop.f32.mrf.mxu0
    %106 = vdwg.mxu0
    %v107 = vmax.f32 %v104, 0.0
    %v108 = vld [vmem:[%s3] sm:$0xff]
    %v109 = vld [vmem:[%s3 + $0x8] sm:$0xff]
    %v110 = vld [vmem:[%s3 + $0x10] sm:$0xff]
    %v111 = vld [vmem:[%s3 + $0x18] sm:$0xff]
    %v112 = vld [vmem:[%s3 + $0x20] sm:$0xff]
    %v113 = vld [vmem:[%s3 + $0x28] sm:$0xff]
    %v114 = vld [vmem:[%s3 + $0x30] sm:$0xff]
    %v115 = vld [vmem:[%s3 + $0x38] sm:$0xff]
    %v116 = vld [vmem:[%s4] sm:$0x1]
    %v118 = vlaneseq
    %v119 = vshrl.u32 %v118, 7
    %v120 = vsub.s32 0, %v119
    %v121 = vrot.slane %v116, %v120
    %vm123 = vcmask 523264
    %v125 = vsel %vm123, %v107, 0
    %127 = vmatprep.subr.mxu0 0.0
    %128 = vmatpush1.msra.mxu0 0.0
    %129 = vmatprep.subr.mxu0 0.0
    %130 = vmatpush1.msra.mxu0 0.0
    %131 = vmatprep.subr.mxu0 0.0
    %132 = vmatpush1.msra.mxu0 0.0
    %133 = vmatprep.subr.mxu0 0.0
    %134 = vmatpush1.msra.mxu0 0.0
    %135 = vmatprep.subr.mxu0 0.0
    %136 = vmatpush1.msra.mxu0 0.0
    %137 = vmatprep.subr.mxu0 0.0
    %138 = vmatpush1.msra.mxu0 0.0
    %139 = vmatprep.subr.mxu0 0.0
    %140 = vmatpush1.msra.mxu0 0.0
    %141 = vmatprep.subr.mxu0 0.0
    %142 = vmatpush1.msra.mxu0 0.0
    %143 = vmatprep.subr.mxu0 0.0
    %144 = vmatpush1.msra.mxu0 %v115
    %145 = vmatprep.subr.mxu0 0.0
    %146 = vmatpush1.msra.mxu0 %v114
    %147 = vmatprep.subr.mxu0 0.0
    %148 = vmatpush1.msra.mxu0 %v113
    %149 = vmatprep.subr.mxu0 0.0
    %150 = vmatpush1.msra.mxu0 %v112
    %151 = vmatprep.subr.mxu0 0.0
    %152 = vmatpush1.msra.mxu0 %v111
    %153 = vmatprep.subr.mxu0 0.0
    %154 = vmatpush1.msra.mxu0 %v110
    %155 = vmatprep.subr.mxu0 0.0
    %156 = vmatpush1.msra.mxu0 %v109
    %157 = vmatprep.subr.mxu0 0.0
    %158 = vmatpush1.msra.mxu0 %v108
    %159 = vmatprep.subr.mxu0 0.0
    %160 = vmatpush2.msra.mxu0 0.0
    %161 = vmatprep.subr.mxu0 0.0
    %162 = vmatpush2.msra.mxu0 0.0
    %163 = vmatprep.subr.mxu0 0.0
    %164 = vmatpush2.msra.mxu0 0.0
    %165 = vmatprep.subr.mxu0 0.0
    %166 = vmatpush2.msra.mxu0 0.0
    %167 = vmatprep.subr.mxu0 0.0
    %168 = vmatpush2.msra.mxu0 0.0
    %169 = vmatprep.subr.mxu0 0.0
    %170 = vmatpush2.msra.mxu0 0.0
    %171 = vmatprep.subr.mxu0 0.0
    %172 = vmatpush2.msra.mxu0 0.0
    %173 = vmatprep.subr.mxu0 0.0
    %174 = vmatpush2.msra.mxu0 0.0
    %175 = vmatprep.subr.mxu0 0.0
    %176 = vmatpush2.msra.mxu0 0.0
    %177 = vmatprep.subr.mxu0 0.0
    %178 = vmatpush2.msra.mxu0 0.0
    %179 = vmatprep.subr.mxu0 0.0
    %180 = vmatpush2.msra.mxu0 0.0
    %181 = vmatprep.subr.mxu0 0.0
    %182 = vmatpush2.msra.mxu0 0.0
    %183 = vmatprep.subr.mxu0 0.0
    %184 = vmatpush2.msra.mxu0 0.0
    %185 = vmatprep.subr.mxu0 0.0
    %186 = vmatpush2.msra.mxu0 0.0
    %187 = vmatprep.subr.mxu0 0.0
    %188 = vmatpush2.msra.mxu0 0.0
    %189 = vmatprep.subr.mxu0 0.0
    %190 = vmatpush2.msra.mxu0 0.0
    %191 = vmatprep.mubr.f32.mxu0 0.0
    %192 = vmatmul.mubr.f32.gmra.mxu0 %v125
    %v193 = vpop.f32.mrf.mxu0
    %v194 = vadd.f32 %v121, %v193
    %v195 = vpop.f32.mrf.mxu0
    %196 = vdwg.mxu0
    %vm197 = vcmask 130048
    %198 = vst.msk [vmem:[#allocation2] sm:$0xff] %vm197, %v194
    // Predicated region
    $region22: #{mlp_forward.1} parent=1 // pred_check
      _
    $region23: #{mlp_forward.1} parent=1 // pred_check_branch
      %200 = sbr.rel (0) target = $region25
    $region24: #{mlp_forward.1} parent=1 // pred_region
      %s202 = ssub.s32 128, 128
      %203 = vsyncadd [#allocation3], %s202
      %s205 = sshll.u32 [#allocation2], 4
      %s206 = int_to_ptr.vmem [resolvable:$true] %s205
      %208 = dma.vmem_to_hbm [thread:$0]  %s206, 128, %s5, [#allocation3]
    $region25: #{mlp_forward.1} parent=1 // pred_fallthru
      _
    // Predicated region
    $region26: #{mlp_forward.1} parent=1 // pred_check
      _
    $region27: #{mlp_forward.1} parent=1 // pred_check_branch
      %210 = sbr.rel (0) target = $region29
    $region28: #{mlp_forward.1} parent=1 // pred_region
      %211 = dma.done [#allocation3], 128
    $region29: #{mlp_forward.1} parent=1 // pred_fallthru
      _
    %212 = vsyncpa [#allocation3], 1

</llo_original>
